<compile_context>
chip_gen: v5e
topology: v5e:2x2
jax: 0.10.0
libtpu: 0.0.40
codegen_flags: <defaults>
</compile_context>

<pallas_src>
import math
from types import SimpleNamespace

import jax
import jax.numpy as jnp
from jax import lax
from jax.experimental import pallas as pl
from jax.experimental.pallas import tpu as pltpu


# -----------------------------------------------------------------------------
# Hardware / tiling helpers
# -----------------------------------------------------------------------------
def _vmem_budget_bytes():
    """Generation-aware VMEM budget (v5e/v6e: 128 MiB physical, v7x: 64 MiB)."""
    try:
        cap = int(pltpu.get_tpu_info().vmem_capacity_bytes)
    except Exception:                       # CPU interpret mode / older jax
        cap = 64 * 1024 * 1024
    return max(16 * 1024 * 1024, min(int(cap * 0.75), 100 * 1024 * 1024))


def _sublane_multiple(dtype):
    # packed dtypes need 32/16-row multiples to avoid relayout copies
    return {1: 32, 2: 16, 4: 8}.get(jnp.dtype(dtype).itemsize, 8)


def _pick_row_tile(Rp0, Lp, in_dtype, budget):
    """Row tile ~budget/6 bytes (>=1 MiB, <=16 MiB), packed-sublane aligned."""
    target = max(1 << 20, min(16 << 20, budget // 6))
    rows = max(1, target // (Lp * 4))
    mult = _sublane_multiple(in_dtype)
    rows = max(mult, (rows // mult) * mult)
    rp_full = -(-Rp0 // mult) * mult
    return min(rows, rp_full)


# -----------------------------------------------------------------------------
# Tiling-independent uniform noise: hash of the absolute flat voxel index.
# uint32 wraparound on (seed + idx) is intentional / benign.
# -----------------------------------------------------------------------------
def _uniform01(flat_idx_i32, seed_i32):
    x = flat_idx_i32.astype(jnp.uint32)
    s = (seed_i32.astype(jnp.uint32) + jnp.uint32(1)) * jnp.uint32(0x9E3779B1)
    x = x + s
    x = x ^ (x >> 16)
    x = x * jnp.uint32(0x7FEB352D)
    x = x ^ (x >> 15)
    x = x * jnp.uint32(0x846CA68B)
    x = x ^ (x >> 16)
    # top 24 bits -> uniform [0, 1)
    return (x >> 8).astype(jnp.int32).astype(jnp.float32) * jnp.float32(
        1.0 / (1 << 24))


# -----------------------------------------------------------------------------
# Fused single-launch kernel (slab resident in VMEM):
#   invert -> brightness -> per-Z contrast mean + blend -> noise -> normalize
# -----------------------------------------------------------------------------
def _make_fused_kernel(do_invert, do_brightness, do_contrast, do_noise,
                       noise_gamma, N, Z, Lp, needs_mask):
    def kernel(params_ref, seed_ref, zmask_ref, img_ref, out_ref):
        x = img_ref[...].astype(jnp.float32)                    # (Rp, Lp)

        flat = None
        if needs_mask or do_noise:
            row = lax.broadcasted_iota(jnp.int32, x.shape, 0)
            lane = lax.broadcasted_iota(jnp.int32, x.shape, 1)
            flat = row * Lp + lane
        valid = (flat < N) if needs_mask else None

        if do_invert:                                           # 255 - x
            x = 255.0 - x
        if do_brightness:                                       # clip(x+b,0,255)
            x = jnp.clip(x + params_ref[0], 0.0, 255.0)

        if do_contrast:
            # per-Z-slice mean (torchvision adjust_contrast with Z as batch dim,
            # div/mul 255 folded away).  One-hot lane->Z contraction, no Z loop.
            # TODO(synk): C==3 rgb_to_grayscale channel weighting not modeled.
            xm = jnp.where(valid, x, 0.0) if needs_mask else x
            colsum = jnp.sum(xm, axis=0, keepdims=True)          # (1, Lp)
            oh = zmask_ref[...]                                  # (Z, Lp)
            sums_z = jnp.sum(colsum * oh, axis=1, keepdims=True)  # (Z, 1)
            mean_z = sums_z * jnp.float32(float(Z) / float(N))
            m_row = jnp.sum(mean_z * oh, axis=0, keepdims=True)   # (1, Lp)
            c = params_ref[1]
            x = jnp.clip(c * x + (1.0 - c) * m_row, 0.0, 255.0)

        if do_noise:                                            # + U[0,1)*gamma
            x = x + _uniform01(flat, seed_ref[0]) * jnp.float32(noise_gamma)

        # normalize: subtract global mean (dataset_std == 1 per reference)
        xm = jnp.where(valid, x, 0.0) if needs_mask else x
        mean = jnp.sum(xm) * jnp.float32(1.0 / float(N))
        out_ref[...] = x - mean

    return kernel


# -----------------------------------------------------------------------------
# Tiled fallback (slab too large for VMEM residency)
# -----------------------------------------------------------------------------
def _make_stats_kernel(do_invert, do_brightness, N, Lp, TR, needs_mask):
    """Per-lane column sums of the post invert/brightness image (accumulator)."""
    def kernel(params_ref, img_ref, sums_ref):
        r = pl.program_id(0)

        @pl.when(r == 0)
        def _init():
            sums_ref[...] = jnp.zeros_like(sums_ref)

        x = img_ref[...].astype(jnp.float32)                    # (TR, Lp)
        if do_invert:
            x = 255.0 - x
        if do_brightness:
            x = jnp.clip(x + params_ref[0], 0.0, 255.0)
        if needs_mask:
            row = lax.broadcasted_iota(jnp.int32, x.shape, 0) + r * TR
            lane = lax.broadcasted_iota(jnp.int32, x.shape, 1)
            x = jnp.where(row * Lp + lane < N, x, 0.0)
        colsum = jnp.sum(x, axis=0, keepdims=True)              # (1, Lp)
        sums_ref[...] = sums_ref[...] + jnp.broadcast_to(colsum, sums_ref.shape)

    return kernel


def _make_transform_kernel(do_invert, do_brightness, do_contrast, do_noise,
                           noise_gamma, N, Lp, TR, needs_mask):
    def kernel(params_ref, seed_ref, mrow_ref, img_ref, y_ref, psum_ref):
        r = pl.program_id(0)
        x = img_ref[...].astype(jnp.float32)                    # (TR, Lp)

        if do_invert:
            x = 255.0 - x
        if do_brightness:
            x = jnp.clip(x + params_ref[0], 0.0, 255.0)
        if do_contrast:
            c = params_ref[1]
            x = jnp.clip(c * x + (1.0 - c) * mrow_ref[...], 0.0, 255.0)

        flat = None
        if needs_mask or do_noise:
            row = lax.broadcasted_iota(jnp.int32, x.shape, 0) + r * TR
            lane = lax.broadcasted_iota(jnp.int32, x.shape, 1)
            flat = row * Lp + lane

        if do_noise:
            x = x + _uniform01(flat, seed_ref[0]) * jnp.float32(noise_gamma)

        y_ref[...] = x

        # Per-tile partial sum for the global mean: exact total stored once,
        # rest zeros (no block-shape-dependent fixup constant).
        xs = jnp.where(flat < N, x, 0.0) if needs_mask else x
        total = jnp.sum(xs)
        r8 = lax.broadcasted_iota(jnp.int32, (8, 128), 0)
        l8 = lax.broadcasted_iota(jnp.int32, (8, 128), 1)
        psum_ref[...] = jnp.where((r8 == 0) & (l8 == 0), total, 0.0)

    return kernel


def _normalize_kernel(mean_ref, y_ref, out_ref):
    out_ref[...] = y_ref[...] - mean_ref[0]


# -----------------------------------------------------------------------------
# Intensity pipeline wrapper
# -----------------------------------------------------------------------------
def intensity_pipeline_pallas(image, brightness_val, contrast_val, seed,
                              gates, noise_gamma):
    """image: (C, X, Y, Z) in its native dtype.  Returns float32 (C, X, Y, Z)."""
    do_invert, do_brightness, do_contrast, do_noise = gates
    C, X, Y, Z = image.shape
    N = C * X * Y * Z
    budget = _vmem_budget_bytes()

    # Lane-dense slab geometry: Lp multiple of 128 (full vregs, unmasked vst)
    # and of Z (lane % Z == flat_index % Z => per-Z mean is a lane row).
    Lp = (128 * Z) // math.gcd(128, Z)
    Rp0 = -(-N // Lp)

    # Fused path only when the slab is small enough to sit in VMEM; for such
    # small slabs the second v7x TensorCore gain is below launch overhead, the
    # tiled fallback keeps a 'parallel' row axis for megacore.
    fused = Rp0 * Lp * 4 * 6 <= budget
    if fused:
        TR = Rp = Rp0
    else:
        TR = _pick_row_tile(Rp0, Lp, image.dtype, budget)
        Rp = -(-Rp0 // TR) * TR
    nR = Rp // TR

    pad = Rp * Lp - N
    needs_mask = pad != 0
    flat = image.reshape(-1)
    if pad:
        # TODO(synk): one extra slab copy when Lp does not divide the voxel
        # count; the reshape is free whenever N % lcm(Z,128) == 0.
        flat = jnp.pad(flat, (0, pad))
    slab = flat.reshape(Rp, Lp)

    params = jnp.stack([jnp.asarray(brightness_val, jnp.float32),
                        jnp.asarray(contrast_val, jnp.float32)])
    seed = jnp.asarray(seed, jnp.int32).reshape(1)

    if fused:
        lane_ids = jnp.arange(Lp, dtype=jnp.int32)
        z_ids = jnp.arange(Z, dtype=jnp.int32)
        zmask = (lane_ids[None, :] % Z == z_ids[:, None]).astype(jnp.float32)

        out2d = pl.pallas_call(
            _make_fused_kernel(do_invert, do_brightness, do_contrast, do_noise,
                               float(noise_gamma), N, Z, Lp, needs_mask),
            out_shape=jax.ShapeDtypeStruct((Rp, Lp), jnp.float32),
            grid=(1,),
            in_specs=[
                pl.BlockSpec(memory_space=pltpu.MemorySpace.SMEM),  # params (2,)
                pl.BlockSpec(memory_space=pltpu.MemorySpace.SMEM),  # seed (1,)
                pl.BlockSpec((Z, Lp), lambda i: (0, 0)),            # lane->Z one-hot
                pl.BlockSpec((Rp, Lp), lambda i: (0, 0)),           # image slab
            ],
            out_specs=pl.BlockSpec((Rp, Lp), lambda i: (0, 0)),
            compiler_params=pltpu.CompilerParams(
                dimension_semantics=("arbitrary",), vmem_limit_bytes=budget),
        )(params, seed, zmask, slab)
    else:
        # ---- Pass 1: contrast stats (only if the contrast gate fired) -------
        if do_contrast:
            sums = pl.pallas_call(
                _make_stats_kernel(do_invert, do_brightness, N, Lp, TR,
                                   needs_mask),
                out_shape=jax.ShapeDtypeStruct((8, Lp), jnp.float32),
                grid=(nR,),
                in_specs=[
                    pl.BlockSpec(memory_space=pltpu.MemorySpace.SMEM),
                    pl.BlockSpec((TR, Lp), lambda r: (r, 0)),
                ],
                out_specs=pl.BlockSpec((8, Lp), lambda r: (0, 0)),  # accumulator
                compiler_params=pltpu.CompilerParams(
                    dimension_semantics=("arbitrary",), vmem_limit_bytes=budget),
            )(params, slab)
            # lane -> per-Z-slice fold in tiny JAX glue (no in-kernel Z loop)
            mean_z = sums[0].reshape(Lp // Z, Z).sum(axis=0) * (
                float(Z) / float(N))
            m_row = jnp.tile(mean_z, Lp // Z).reshape(1, Lp).astype(jnp.float32)
        else:
            m_row = jnp.zeros((1, Lp), jnp.float32)

        # ---- Pass 2: fused transform + per-tile partial sums ----------------
        y, psums = pl.pallas_call(
            _make_transform_kernel(do_invert, do_brightness, do_contrast,
                                   do_noise, float(noise_gamma), N, Lp, TR,
                                   needs_mask),
            out_shape=(jax.ShapeDtypeStruct((Rp, Lp), jnp.float32),
                       jax.ShapeDtypeStruct((8 * nR, 128), jnp.float32)),
            grid=(nR,),
            in_specs=[
                pl.BlockSpec(memory_space=pltpu.MemorySpace.SMEM),
                pl.BlockSpec(memory_space=pltpu.MemorySpace.SMEM),
                pl.BlockSpec((1, Lp), lambda r: (0, 0)),
                pl.BlockSpec((TR, Lp), lambda r: (r, 0)),
            ],
            out_specs=(pl.BlockSpec((TR, Lp), lambda r: (r, 0)),
                       pl.BlockSpec((8, 128), lambda r: (r, 0))),
            compiler_params=pltpu.CompilerParams(
                dimension_semantics=("parallel",), vmem_limit_bytes=budget),
        )(params, seed, m_row, slab)

        mean_all = (jnp.sum(psums) * (1.0 / float(N))).astype(
            jnp.float32).reshape(1)

        # ---- Pass 3: subtract global mean (dataset_std == 1); alias y->out --
        out2d = pl.pallas_call(
            _normalize_kernel,
            out_shape=jax.ShapeDtypeStruct((Rp, Lp), jnp.float32),
            grid=(nR,),
            in_specs=[
                pl.BlockSpec(memory_space=pltpu.MemorySpace.SMEM),
                pl.BlockSpec((TR, Lp), lambda r: (r, 0)),
            ],
            out_specs=pl.BlockSpec((TR, Lp), lambda r: (r, 0)),
            input_output_aliases={1: 0},
            compiler_params=pltpu.CompilerParams(
                dimension_semantics=("parallel",), vmem_limit_bytes=budget),
        )(mean_all, y)

    out_flat = out2d.reshape(-1)
    if pad:
        out_flat = out_flat[:N]
    return out_flat.reshape(C, X, Y, Z)


# -----------------------------------------------------------------------------
# JAX glue: crops, flips, skeleton bookkeeping (data movement, no hot compute)
# -----------------------------------------------------------------------------
def _crop1(image, masks, skel_mask, skeletons, aug):
    extra = 300
    C, X, Y, Z = image.shape
    w = aug.CROP_WIDTH + extra if aug.CROP_WIDTH + extra <= X else X
    h = aug.CROP_HEIGHT + extra if aug.CROP_HEIGHT + extra <= Y else Y
    d = aug.CROP_DEPTH if aug.CROP_DEPTH <= Z else Z

    # random.choice over skeleton keys -> deterministic first key here.
    key = sorted(skeletons.keys())[0]
    center = jnp.mean(skeletons[key].astype(jnp.float32), axis=0)

    x0 = jnp.clip((center[0] - (w // 2)).astype(jnp.int32), 0, X - w)
    y0 = jnp.clip((center[1] - (h // 2)).astype(jnp.int32), 0, Y - h)
    z0 = jnp.clip((center[2] - (d // 2)).astype(jnp.int32), 0, Z - d)

    image = lax.dynamic_slice(image, (0, x0, y0, z0), (C, w, h, d))
    masks = lax.dynamic_slice(masks, (0, x0, y0, z0), (C, w, h, d))
    skel_mask = lax.dynamic_slice(skel_mask, (0, x0, y0, z0), (C, w, h, d))

    offs = jnp.stack([x0, y0, z0]).astype(jnp.float32)
    skeletons = {k: v.astype(jnp.float32) - offs for k, v in skeletons.items()}
    return image, masks, skel_mask, skeletons, center, (x0, y0, z0)


def _crop2(image, masks, skel_mask, skeletons, center, xyz, aug):
    C, X, Y, Z = image.shape
    w = aug.CROP_WIDTH if aug.CROP_WIDTH < X else X
    h = aug.CROP_HEIGHT if aug.CROP_HEIGHT < Y else Y
    d = aug.CROP_DEPTH if aug.CROP_DEPTH < Z else Z

    x0p, y0p, z0p = xyz
    center = center - jnp.stack([x0p, y0p, z0p]).astype(jnp.float32)

    x0 = jnp.clip((center[0] - (w // 2)).astype(jnp.int32), 0, X - w)
    y0 = jnp.clip((center[1] - (h // 2)).astype(jnp.int32), 0, Y - h)
    z0 = jnp.clip((center[2] - (d // 2)).astype(jnp.int32), 0, Z - d)

    image = lax.dynamic_slice(image, (0, x0, y0, z0), (C, w, h, d))
    masks = lax.dynamic_slice(masks, (0, x0, y0, z0), (C, w, h, d))
    skel_mask = lax.dynamic_slice(skel_mask, (0, x0, y0, z0), (C, w, h, d))

    offs = jnp.stack([x0, y0, z0]).astype(jnp.float32)
    new_skels = {}
    for k, v in skeletons.items():
        toinsert = v - offs
        # reference: replace if max < w+30, elif min > -20 -> logical OR
        cond = jnp.logical_or(jnp.max(toinsert) < w + 30, jnp.min(toinsert) > -20)
        new_skels[k] = jnp.where(cond, toinsert, v)
    return image, masks, skel_mask, new_skels


def _flip(image, masks, skel_mask, skeletons, axis):
    image = jnp.flip(image, axis=axis)
    masks = jnp.flip(masks, axis=axis)
    skel_mask = jnp.flip(skel_mask, axis=axis)
    coord = axis - 1  # axis 1->x, 2->y, 3->z
    skeletons = {k: v.at[:, coord].set(image.shape[axis] - v[:, coord])
                 for k, v in skeletons.items()}
    return image, masks, skel_mask, skeletons


# -----------------------------------------------------------------------------
# Forward pass mirroring SparseTransformFromCfg.forward
# -----------------------------------------------------------------------------
def sparse_transform_forward(data_dict, cfg, rng):
    aug = cfg.AUGMENTATION
    image = data_dict["image"]
    masks = data_dict["background"]
    skel_mask = data_dict["skele_masks"]
    skeletons = dict(data_dict["skeletons"])

    k_gate, k_bright, k_contrast, k_seed = jax.random.split(rng, 4)

    # One batched device->host transfer for all stochastic gates.
    u = jax.device_get(jax.random.uniform(k_gate, (9,)))
    elastic_gate = float(u[0]) < aug.ELASTIC_RATE
    affine_gate = float(u[1]) < aug.AFFINE_RATE
    flipx_gate = float(u[2]) < aug.FLIP_RATE
    flipy_gate = float(u[3]) < aug.FLIP_RATE
    flipz_gate = float(u[4]) < aug.FLIP_RATE
    invert_gate = float(u[5]) < aug.BRIGHTNESS_RATE
    bright_gate = float(u[6]) < aug.BRIGHTNESS_RATE
    contrast_gate = float(u[7]) < aug.CONTRAST_RATE
    noise_gate = float(u[8]) < aug.NOISE_RATE

    # Sampled values stay on device (SMEM scalars -> no per-value recompiles).
    brightness_val = jax.random.uniform(
        k_bright, (), minval=aug.BRIGHTNESS_RANGE[0], maxval=aug.BRIGHTNESS_RANGE[1])
    contrast_val = jax.random.uniform(
        k_contrast, (), minval=aug.CONTRAST_RANGE[0], maxval=aug.CONTRAST_RANGE[1])
    noise_seed = jax.random.randint(k_seed, (1,), 0, 2 ** 31 - 1, dtype=jnp.int32)

    image, masks, skel_mask, skeletons, center, xyz = _crop1(
        image, masks, skel_mask, skeletons, aug)

    # TODO(synk): elastic_deform (random grid_sample warp) and torchvision
    # affine resampling have no clean Pallas equivalent here; their configured
    # rates are 0.0, so these branches never fire.
    if elastic_gate:
        pass
    if affine_gate:
        pass

    image, masks, skel_mask, skeletons = _crop2(
        image, masks, skel_mask, skeletons, center, xyz, aug)

    if flipx_gate:
        image, masks, skel_mask, skeletons = _flip(image, masks, skel_mask, skeletons, 1)
    if flipy_gate:
        image, masks, skel_mask, skeletons = _flip(image, masks, skel_mask, skeletons, 2)
    if flipz_gate:
        image, masks, skel_mask, skeletons = _flip(image, masks, skel_mask, skeletons, 3)

    image = intensity_pipeline_pallas(
        image, brightness_val, contrast_val, noise_seed,
        gates=(invert_gate, bright_gate, contrast_gate, noise_gate),
        noise_gamma=float(aug.NOISE_GAMMA))

    out = dict(data_dict)
    out["image"] = image
    out["background"] = masks
    out["skele_masks"] = skel_mask
    out["skeletons"] = skeletons
    return out


# -----------------------------------------------------------------------------
# Deterministic example
# -----------------------------------------------------------------------------
def make_cfg():
    return SimpleNamespace(AUGMENTATION=SimpleNamespace(
        CROP_WIDTH=8, CROP_HEIGHT=8, CROP_DEPTH=4,
        FLIP_RATE=1.0,
        BRIGHTNESS_RATE=1.0, BRIGHTNESS_RANGE=(-10.0, 10.0),
        NOISE_GAMMA=0.1, NOISE_RATE=1.0,
        CONTRAST_RATE=1.0, CONTRAST_RANGE=(0.75, 1.25),
        AFFINE_RATE=0.0, AFFINE_SCALE=(0.85, 1.1),
        AFFINE_SHEAR=(-7.0, 7.0), AFFINE_YAW=(-180.0, 180.0),
        ELASTIC_RATE=0.0, ELASTIC_GRID_SHAPE=(6, 6, 2),
        ELASTIC_GRID_MAGNITUDE=(0.05, 0.05, 0.01),
        BAKE_SKELETON_ANISOTROPY=(1, 1, 5),
    ))


if __name__ == "__main__":
    key = jax.random.PRNGKey(0)
    k_img, k_mask, k_skel, k_p1, k_p2, k_fwd = jax.random.split(key, 6)

    C, X, Y, Z = 1, 16, 16, 8
    image = jax.random.uniform(k_img, (C, X, Y, Z), jnp.float32, 0.0, 255.0)
    masks = (jax.random.uniform(k_mask, (C, X, Y, Z)) > 0.5).astype(jnp.float32)
    skel_mask = (jax.random.uniform(k_skel, (C, X, Y, Z)) > 0.7).astype(jnp.float32)
    bounds = jnp.array([X, Y, Z], jnp.float32)
    skeletons = {
        1: jax.random.uniform(k_p1, (5, 3), jnp.float32) * bounds,
        2: jax.random.uniform(k_p2, (7, 3), jnp.float32) * bounds,
    }

    data_dict = {
        "image": image,
        "background": masks,
        "skele_masks": skel_mask,
        "skeletons": skeletons,
    }

    cfg = make_cfg()
    out = sparse_transform_forward(data_dict, cfg, k_fwd)

    jax.block_until_ready(out["image"])
    jax.block_until_ready(out["background"])
    jax.block_until_ready(out["skele_masks"])
    for v in out["skeletons"].values():
        jax.block_until_ready(v)

    assert out["image"].shape == (1, 8, 8, 4)
    assert out["image"].dtype == jnp.float32
    print("KERNEL_OK")
</pallas_src>

<mosaic_0001>
module attributes {stable_mosaic.version = 11 : i64} {
  func.func @kernel(%arg0: i32, %arg1: memref<2xf32, #tpu.memory_space<smem>>, %arg2: memref<1xi32, #tpu.memory_space<smem>>, %arg3: memref<4x128xf32, #tpu.memory_space<vmem>>, %arg4: memref<2x128xf32, #tpu.memory_space<vmem>>, %arg5: memref<2x128xf32, #tpu.memory_space<vmem>>) attributes {dimension_semantics = [#tpu.dimension_semantics<arbitrary>], iteration_bounds = array<i64: 1>, scalar_prefetch = 0 : i64, scratch_operands = 0 : i64, tpu.core_type = #tpu.core_type<tc>, window_params = [{transform_indices = @transform_0, window_bounds = array<i64: 2>}, {transform_indices = @transform_1, window_bounds = array<i64: 1>}, {pipeline_mode = #tpu.pipeline_mode<synchronous>, transform_indices = @transform_2, window_bounds = array<i64: 4, 128>}, {pipeline_mode = #tpu.pipeline_mode<synchronous>, transform_indices = @transform_3, window_bounds = array<i64: 2, 128>}, {pipeline_mode = #tpu.pipeline_mode<synchronous>, transform_indices = @transform_4, window_bounds = array<i64: 2, 128>}]} {
    %c0 = arith.constant 0 : index
    %c0_0 = arith.constant 0 : index
    %0 = vector.load %arg4[%c0, %c0_0] : memref<2x128xf32, #tpu.memory_space<vmem>>, vector<2x128xf32>
    %1 = tpu.iota {dimensions = array<i32: 0>} : vector<2x128xi32>
    %2 = tpu.iota {dimensions = array<i32: 1>} : vector<2x128xi32>
    %c128_i32 = arith.constant 128 : i32
    %3 = vector.broadcast %c128_i32 : i32 to vector<2x128xi32>
    %4 = arith.muli %1, %3 : vector<2x128xi32>
    %5 = arith.addi %4, %2 : vector<2x128xi32>
    %cst = arith.constant 2.550000e+02 : f32
    %6 = vector.broadcast %cst : f32 to vector<2x128xf32>
    %7 = arith.subf %6, %0 : vector<2x128xf32>
    %c0_1 = arith.constant 0 : index
    %8 = memref.load %arg1[%c0_1] : memref<2xf32, #tpu.memory_space<smem>>
    %9 = vector.broadcast %8 : f32 to vector<2x128xf32>
    %10 = arith.addf %7, %9 : vector<2x128xf32>
    %cst_2 = arith.constant 0.000000e+00 : f32
    %cst_3 = arith.constant 2.550000e+02 : f32
    %11 = vector.broadcast %cst_2 : f32 to vector<2x128xf32>
    %12 = arith.maximumf %11, %10 : vector<2x128xf32>
    %13 = vector.broadcast %cst_3 : f32 to vector<2x128xf32>
    %14 = arith.minimumf %13, %12 : vector<2x128xf32>
    %cst_4 = arith.constant dense<0.000000e+00> : vector<128xf32>
    %15 = vector.multi_reduction <add>, %14, %cst_4 [0] : vector<2x128xf32> to vector<128xf32>
    %16 = vector.shape_cast %15 : vector<128xf32> to vector<1x128xf32>
    %c0_5 = arith.constant 0 : index
    %c0_6 = arith.constant 0 : index
    %17 = vector.load %arg3[%c0_5, %c0_6] : memref<4x128xf32, #tpu.memory_space<vmem>>, vector<4x128xf32>
    %18 = vector.broadcast %16 : vector<1x128xf32> to vector<4x128xf32>
    %19 = arith.mulf %18, %17 : vector<4x128xf32>
    %cst_7 = arith.constant dense<0.000000e+00> : vector<4xf32>
    %20 = vector.multi_reduction <add>, %19, %cst_7 [1] : vector<4x128xf32> to vector<4xf32>
    %21 = vector.shape_cast %20 : vector<4xf32> to vector<4x1xf32>
    %cst_8 = arith.constant 1.562500e-02 : f32
    %22 = vector.broadcast %cst_8 : f32 to vector<4x1xf32>
    %23 = arith.mulf %21, %22 : vector<4x1xf32>
    %24 = vector.broadcast %23 : vector<4x1xf32> to vector<4x128xf32>
    %25 = arith.mulf %24, %17 : vector<4x128xf32>
    %cst_9 = arith.constant dense<0.000000e+00> : vector<128xf32>
    %26 = vector.multi_reduction <add>, %25, %cst_9 [0] : vector<4x128xf32> to vector<128xf32>
    %27 = vector.shape_cast %26 : vector<128xf32> to vector<1x128xf32>
    %c1 = arith.constant 1 : index
    %28 = memref.load %arg1[%c1] : memref<2xf32, #tpu.memory_space<smem>>
    %29 = vector.broadcast %28 : f32 to vector<2x128xf32>
    %30 = arith.mulf %29, %14 : vector<2x128xf32>
    %cst_10 = arith.constant 1.000000e+00 : f32
    %31 = arith.subf %cst_10, %28 : f32
    %32 = vector.broadcast %31 : f32 to vector<1x128xf32>
    %33 = arith.mulf %32, %27 : vector<1x128xf32>
    %34 = vector.broadcast %33 : vector<1x128xf32> to vector<2x128xf32>
    %35 = arith.addf %30, %34 : vector<2x128xf32>
    %cst_11 = arith.constant 0.000000e+00 : f32
    %cst_12 = arith.constant 2.550000e+02 : f32
    %36 = vector.broadcast %cst_11 : f32 to vector<2x128xf32>
    %37 = arith.maximumf %36, %35 : vector<2x128xf32>
    %38 = vector.broadcast %cst_12 : f32 to vector<2x128xf32>
    %39 = arith.minimumf %38, %37 : vector<2x128xf32>
    %c0_13 = arith.constant 0 : index
    %40 = memref.load %arg2[%c0_13] : memref<1xi32, #tpu.memory_space<smem>>
    %c1_i32 = arith.constant 1 : i32
    %41 = arith.addi %40, %c1_i32 : i32
    %c-1640531535_i32 = arith.constant -1640531535 : i32
    %42 = arith.muli %41, %c-1640531535_i32 : i32
    %43 = vector.broadcast %42 : i32 to vector<2x128xi32>
    %44 = arith.addi %5, %43 : vector<2x128xi32>
    %c16_i32 = arith.constant 16 : i32
    %45 = vector.broadcast %c16_i32 : i32 to vector<2x128xi32>
    %46 = arith.shrui %44, %45 : vector<2x128xi32>
    %47 = arith.xori %44, %46 : vector<2x128xi32>
    %c2146121005_i32 = arith.constant 2146121005 : i32
    %48 = vector.broadcast %c2146121005_i32 : i32 to vector<2x128xi32>
    %49 = arith.muli %47, %48 : vector<2x128xi32>
    %c15_i32 = arith.constant 15 : i32
    %50 = vector.broadcast %c15_i32 : i32 to vector<2x128xi32>
    %51 = arith.shrui %49, %50 : vector<2x128xi32>
    %52 = arith.xori %49, %51 : vector<2x128xi32>
    %c-2073254261_i32 = arith.constant -2073254261 : i32
    %53 = vector.broadcast %c-2073254261_i32 : i32 to vector<2x128xi32>
    %54 = arith.muli %52, %53 : vector<2x128xi32>
    %c16_i32_14 = arith.constant 16 : i32
    %55 = vector.broadcast %c16_i32_14 : i32 to vector<2x128xi32>
    %56 = arith.shrui %54, %55 : vector<2x128xi32>
    %57 = arith.xori %54, %56 : vector<2x128xi32>
    %c8_i32 = arith.constant 8 : i32
    %58 = vector.broadcast %c8_i32 : i32 to vector<2x128xi32>
    %59 = arith.shrui %57, %58 : vector<2x128xi32>
    %60 = arith.sitofp %59 : vector<2x128xi32> to vector<2x128xf32>
    %cst_15 = arith.constant 5.96046448E-8 : f32
    %61 = vector.broadcast %cst_15 : f32 to vector<2x128xf32>
    %62 = arith.mulf %60, %61 : vector<2x128xf32>
    %cst_16 = arith.constant 1.000000e-01 : f32
    %63 = vector.broadcast %cst_16 : f32 to vector<2x128xf32>
    %64 = arith.mulf %62, %63 : vector<2x128xf32>
    %65 = arith.addf %39, %64 : vector<2x128xf32>
    %66 = vector.shape_cast %65 : vector<2x128xf32> to vector<1x2x128xf32>
    %cst_17 = arith.constant dense<0.000000e+00> : vector<1xf32>
    %67 = vector.multi_reduction <add>, %66, %cst_17 [1, 2] : vector<1x2x128xf32> to vector<1xf32>
    %68 = vector.shape_cast %67 : vector<1xf32> to vector<1x1x1xf32>
    %69 = vector.extract %68[0, 0, 0] : f32 from vector<1x1x1xf32>
    %cst_18 = arith.constant 3.906250e-03 : f32
    %70 = arith.mulf %69, %cst_18 : f32
    %71 = vector.broadcast %70 : f32 to vector<2x128xf32>
    %72 = arith.subf %65, %71 : vector<2x128xf32>
    %c0_19 = arith.constant 0 : index
    %c0_20 = arith.constant 0 : index
    %73 = vector.load %arg5[%c0_19, %c0_20] : memref<2x128xf32, #tpu.memory_space<vmem>>, vector<2x128xf32>
    tpu.vector_store %arg5[%c0_19, %c0_20], %72 {strides = array<i32>} : memref<2x128xf32, #tpu.memory_space<vmem>>, vector<2x128xf32>,
    return
  }
  func.func @transform_0(%arg0: i32) -> i32 {
    %c0_i32 = arith.constant 0 : i32
    %c0_i32_0 = arith.constant 0 : i32
    return %c0_i32 : i32
  }
  func.func @transform_1(%arg0: i32) -> i32 {
    %c0_i32 = arith.constant 0 : i32
    %c0_i32_0 = arith.constant 0 : i32
    return %c0_i32 : i32
  }
  func.func @transform_2(%arg0: i32) -> (i32, i32) {
    %c0_i32 = arith.constant 0 : i32
    %c0_i32_0 = arith.constant 0 : i32
    %c0_i32_1 = arith.constant 0 : i32
    return %c0_i32, %c0_i32_0 : i32, i32
  }
  func.func @transform_3(%arg0: i32) -> (i32, i32) {
    %c0_i32 = arith.constant 0 : i32
    %c0_i32_0 = arith.constant 0 : i32
    %c0_i32_1 = arith.constant 0 : i32
    return %c0_i32, %c0_i32_0 : i32, i32
  }
  func.func @transform_4(%arg0: i32) -> (i32, i32) {
    %c0_i32 = arith.constant 0 : i32
    %c0_i32_0 = arith.constant 0 : i32
    %c0_i32_1 = arith.constant 0 : i32
    return %c0_i32, %c0_i32_0 : i32, i32
  }
}

</mosaic_0001>

<llo_original>
// kernel: tpu_custom_call.1
$region0: #{tpu_custom_call.1}
  #allocation0 [shape = 'u32[]', space=smem, size = 0x4, offset = 0x4, fixed_abs, tag = 'smem constant byte address 0x4 - core index']
  #allocation1 [shape = 'u32[72,128]{1,0:T(1,128)}', space=vmem, size = 0x9000, scoped, tag = 'internal scratch']
  #allocation2 [shape = 's32[1]{0:T(128)S(6)}', space=smem, size = 0x200, scoped, tag = 'scoped memory for tpu_custom_call.1']
  %s0 = inlined_call_operand.vmem [shape: f32[2], index: 0, kind: input, shape index: {}]
  %s1 = inlined_call_operand.<no memory space> [shape: s32[1], index: 1, kind: input, shape index: {}]
  %s2 = inlined_call_operand.hbm [shape: f32[4,128], index: 2, kind: input, shape index: {}]
  %s3 = inlined_call_operand.vmem [shape: f32[2,128], index: 3, kind: input, shape index: {}]
  %s4 = inlined_call_operand.hbm [shape: f32[2,128], index: 4, kind: output, shape index: {}]
  %s5 = sld [smem:[#allocation0]]
  $region34: #{tpu_custom_call.1} parent=0
    _
  %s7 = ssub.s32 1, %s5
  %s8 = scalar_select 0, %s7, %s5
  %9 = sst [smem:[#allocation2]] %s1
  $region1: #{tpu_custom_call.1} parent=0
    #allocation3 [shape = 'u8[512]{0}', space=smem, size = 0x200, scoped, tag = 'input window, operand 0, single buffered']
    #allocation4 [shape = 's32[1]{0}', space=sflag, size = 0x4, scoped, tag = 'scoped memory for tpu_custom_call.1']
    #allocation5 [shape = 's32[1]{0}', space=sflag, size = 0x4, scoped, tag = 'scoped memory for tpu_custom_call.1']
    #allocation6 [shape = 's32[1]{0}', space=sflag, size = 0x4, scoped, tag = 'scoped memory for tpu_custom_call.1']
    #allocation7 [shape = 'u8[2048]{0}', space=vmem, size = 0x800, scoped, tag = 'input window, operand 2, single buffered']
    #allocation8 [shape = 'u8[1024]{0}', space=vmem, size = 0x400, scoped, tag = 'output window, operand 0, single buffered']
    %10 = vsyncpa [#allocation6], 0
    %11 = vsyncpa [#allocation4], 0
    %12 = vsyncpa [#allocation5], 0
    // Predicated region
    $region2: #{tpu_custom_call.1} parent=1 // pred_check
      _
    $region3: #{tpu_custom_call.1} parent=1 // pred_check_branch
      %14 = sbr.rel (0) target = $region5
    $region4: #{tpu_custom_call.1} parent=1 // pred_region
      %16 = vsyncadd [#allocation6], 0
      %s18 = sshll.u32 %s0, 4
      %s19 = int_to_ptr.vmem [resolvable:$true] %s18
      %21 = dma.vmem_to_smem %s19, 16, [#allocation3], [#allocation6]
    $region5: #{tpu_custom_call.1} parent=1 // pred_fallthru
      _
    // Predicated region
    $region6: #{tpu_custom_call.1} parent=1 // pred_check
      _
    $region7: #{tpu_custom_call.1} parent=1 // pred_check_branch
      %23 = sbr.rel (0) target = $region9
    $region8: #{tpu_custom_call.1} parent=1 // pred_region
      _
    $region9: #{tpu_custom_call.1} parent=1 // pred_fallthru
      _
    // Predicated region
    $region10: #{tpu_custom_call.1} parent=1 // pred_check
      _
    $region11: #{tpu_custom_call.1} parent=1 // pred_check_branch
      %25 = sbr.rel (0) target = $region13
    $region12: #{tpu_custom_call.1} parent=1 // pred_region
      %27 = vsyncadd [#allocation4], 0
      %s29 = sshll.u32 %s2, 4
      %s30 = int_to_ptr.hbm [resolvable:$true] %s29
      %s31 = sshll.u32 [#allocation7], 4
      %s32 = int_to_ptr.vmem [resolvable:$true] %s31
      %34 = dma.hbm_to_vmem [thread:$0]  %s30, 64, %s32, [#allocation4]
    $region13: #{tpu_custom_call.1} parent=1 // pred_fallthru
      _
    // Predicated region
    $region14: #{tpu_custom_call.1} parent=1 // pred_check
      _
    $region15: #{tpu_custom_call.1} parent=1 // pred_check_branch
      %36 = sbr.rel (0) target = $region17
    $region16: #{tpu_custom_call.1} parent=1 // pred_region
      _
    $region17: #{tpu_custom_call.1} parent=1 // pred_fallthru
      _
    // Predicated region
    $region18: #{tpu_custom_call.1} parent=1 // pred_check
      _
    $region19: #{tpu_custom_call.1} parent=1 // pred_check_branch
      %38 = sbr.rel (0) target = $region21
    $region20: #{tpu_custom_call.1} parent=1 // pred_region
      %40 = dma.done [#allocation6], 16
    $region21: #{tpu_custom_call.1} parent=1 // pred_fallthru
      _
    // Predicated region
    $region22: #{tpu_custom_call.1} parent=1 // pred_check
      _
    $region23: #{tpu_custom_call.1} parent=1 // pred_check_branch
      %42 = sbr.rel (0) target = $region25
    $region24: #{tpu_custom_call.1} parent=1 // pred_region
      %44 = dma.done [#allocation4], 64
    $region25: #{tpu_custom_call.1} parent=1 // pred_fallthru
      _
    %45 = sfence
    %v46 = vld [vmem:[%s3] sm:$0x3]
    %v47 = vlaneseq
    %v48 = vshrl.u32 %v47, 7
    %v49 = vlaneseq
    %v50 = vand.u32 %v49, 127
    %v51 = vmul.u32 %v48, 128
    %v52 = vadd.s32 %v51, %v50
    %v53 = vsub.f32 255.0, %v46
    %s54 = sld [smem:[#allocation3]]
    %v55 = vstv %s54
    %v56 = vadd.f32 %v53, %v55
    %v57 = vmax.f32 %v56, 0.0
    %v58 = vmin.f32 %v57, 255.0
    %vm59 = vcmask 1041408
    %v60 = vsel %vm59, %v58, 0.0
    %v61 = vrot.slane %v60, 4
    %v62 = vadd.f32 %v60, %v61
    %v63 = vrot.slane %v62, 2
    %v64 = vadd.f32 %v62, %v63
    %v65 = vrot.slane %v64, 1
    %v66 = vadd.f32 %v64, %v65
    %v67 = vld [vmem:[#allocation7] sm:$0xf]
    %v68 = vmul.f32 %v66, %v67
    %vm69 = vcmask 1043456
    %v70 = vsel %vm69, %v68, 0.0
    %71 = vadd.xlane.f32.xlu0 %v70
    %v72 = vpop.xlane.xlu0 %71
    %v73 = vmul.f32 %v72, 0.015625
    %v74 = vmul.f32 %v73, %v67
    %v75 = vsel %vm69, %v74, 0.0
    %v76 = vrot.slane %v75, 4
    %v77 = vadd.f32 %v75, %v76
    %v78 = vrot.slane %v77, 2
    %v79 = vadd.f32 %v77, %v78
    %v80 = vrot.slane %v79, 1
    %v81 = vadd.f32 %v79, %v80
    %s82 = sld [smem:[#allocation3 + $0x1]]
    %v83 = vstv %s82
    %v84 = vmul.f32 %v83, %v58
    %s85 = ssub.f32 1.0, %s82
    %v86 = vstv %s85
    %v87 = vmul.f32 %v86, %v81
    %v88 = vadd.f32 %v84, %v87
    %v89 = vmax.f32 %v88, 0.0
    %v90 = vmin.f32 %v89, 255.0
    %s91 = sld [smem:[#allocation2]]
    %s92 = sadd.s32 %s91, 1
    %s93 = smul.u32 %s92, 2654435761
    %v94 = vstv %s93
    %v95 = vadd.s32 %v52, %v94
    %v96 = vshrl.u32 %v95, 16
    %v97 = vxor.u32 %v95, %v96
    %v98 = vmul.u32 %v97, 2146121005
    %v99 = vshrl.u32 %v98, 15
    %v100 = vxor.u32 %v98, %v99
    %v101 = vmul.u32 %v100, 2221713035
    %v102 = vshrl.u32 %v101, 16
    %v103 = vxor.u32 %v101, %v102
    %v104 = vshrl.u32 %v103, 8
    %v105 = vcvt.s32.f32 %v104
    %v106 = vmul.f32 %v105, 5.9604645e-08
    %v107 = vmul.f32 %v106, 0.1
    %v108 = vadd.f32 %v90, %v107
    %v109 = vsel %vm59, %v108, 0.0
    %110 = vadd.xlane.f32.xlu0 %v109
    %v111 = vpop.xlane.xlu0 %110
    %v112 = vrot.slane %v111, 4
    %v113 = vadd.f32 %v111, %v112
    %v114 = vrot.slane %v113, 2
    %v115 = vadd.f32 %v113, %v114
    %v116 = vrot.slane %v115, 1
    %v117 = vadd.f32 %v115, %v116
    %s118 = vtos %v117
    %s119 = smul.f32 %s118, 0.00390625
    %v120 = vstv %s119
    %v121 = vsub.f32 %v108, %v120
    %122 = vst [vmem:[#allocation8] sm:$0x3] %v121
    // Predicated region
    $region26: #{tpu_custom_call.1} parent=1 // pred_check
      _
    $region27: #{tpu_custom_call.1} parent=1 // pred_check_branch
      %124 = sbr.rel (0) target = $region29
    $region28: #{tpu_custom_call.1} parent=1 // pred_region
      %126 = vsyncadd [#allocation5], 0
      %s128 = sshll.u32 [#allocation8], 4
      %s129 = int_to_ptr.vmem [resolvable:$true] %s128
      %s130 = sshll.u32 %s4, 4
      %s131 = int_to_ptr.hbm [resolvable:$true] %s130
      %133 = dma.vmem_to_hbm [thread:$0]  %s129, 32, %s131, [#allocation5]
    $region29: #{tpu_custom_call.1} parent=1 // pred_fallthru
      _
    // Predicated region
    $region30: #{tpu_custom_call.1} parent=1 // pred_check
      _
    $region31: #{tpu_custom_call.1} parent=1 // pred_check_branch
      %135 = sbr.rel (0) target = $region33
    $region32: #{tpu_custom_call.1} parent=1 // pred_region
      %137 = dma.done [#allocation5], 32
    $region33: #{tpu_custom_call.1} parent=1 // pred_fallthru
      _
    %138 = vsyncpa [#allocation4], 1
    %139 = vsyncpa [#allocation5], 1
    %140 = vsyncpa [#allocation6], 1

</llo_original>
